<compile_context>
chip_gen: v5e
topology: v5e:2x2
jax: 0.10.0
libtpu: 0.0.40
codegen_flags: <defaults>
</compile_context>

<pallas_src>
import functools

import jax
import jax.numpy as jnp
import numpy as np
from jax.experimental import pallas as pl
from jax.experimental.pallas import tpu as pltpu


def _make_tap_masks(H, W, lane_batch):
    """(9, lane_batch*H*W) 0/1 f32 halo-validity masks, tap t = ky*3 + kx.

    Lane position l belongs to image l // (H*W); its in-image row/col decide
    whether tap (dy, dx) reads an in-image neighbour. Out-of-image (and
    cross-image) taps are zeroed => zero ("SAME") padding.
    """
    HW = H * W
    local = np.arange(lane_batch * HW) % HW
    row = local // W
    col = local % W
    masks = np.ones((9, lane_batch * HW), np.float32)
    for ky in range(3):
        for kx in range(3):
            dy, dx = ky - 1, kx - 1
            valid = np.ones(lane_batch * HW, dtype=bool)
            if dy == -1:
                valid &= row >= 1
            elif dy == 1:
                valid &= row <= H - 2
            if dx == -1:
                valid &= col >= 1
            elif dx == 1:
                valid &= col <= W - 2
            masks[ky * 3 + kx] = valid.astype(np.float32)
    return jnp.asarray(masks)


def _brm_kernel(m_ref, x_ref, w1_ref, w2_ref, o_ref, *, W):
    """One grid step: (C, L) slab -> x + conv2(relu(conv1(x))).

    m_ref:  (9, L)       resident 0/1 masks, tap t = ky*3 + kx (center unused).
    x_ref:  (C, L)       activations; channels on sublanes, folded spatial on lanes.
    w*_ref: (C, 9*C + 1) packed conv weights, bias folded in as the last column.
    """
    C, L = x_ref.shape
    x = x_ref[...].astype(jnp.float32)
    m = m_ref[...]
    ones = jnp.ones((1, L), jnp.float32)   # pairs with the folded bias column

    def stacked_taps(a):
        # Build the (9*C + 1, L) stacked operand: 9 shifted+masked copies of
        # `a` concatenated along sublanes plus a ones row for the bias.
        rows = []
        for ky in range(3):
            for kx in range(3):
                dy, dx = ky - 1, kx - 1
                s = dy * W + dx                       # flattened spatial offset
                t = ky * 3 + kx
                if s == 0:
                    rows.append(a)                    # center tap: no shift/mask
                else:
                    at = pltpu.roll(a, (-s) % L, axis=1)
                    rows.append(at * m[t:t + 1, :])
        rows.append(ones)
        return jnp.concatenate(rows, axis=0)

    # conv1 (+bias) -> ReLU -> conv2 (+bias): two MXU dots total.
    r = jnp.dot(w1_ref[...], stacked_taps(x), preferred_element_type=jnp.float32)
    r = jnp.maximum(r, 0.0)
    r = jnp.dot(w2_ref[...], stacked_taps(r), preferred_element_type=jnp.float32)

    # Residual add from the same (single) input stream; lane-dense store.
    o_ref[...] = (x + r).astype(o_ref.dtype)


def boundary_refine_forward(x_nchw, w1_hwio, b1, w2_hwio, b2, *, lane_batch=None):
    """x_nchw: (N, C, H, W).  Weights HWIO (3, 3, C, C), biases (C,)."""
    N, C, H, W = x_nchw.shape
    HW = H * W

    if lane_batch is None:
        # Fold as many images as fit a modest activation budget into the lane
        # axis (best on single-TC v5e/v6e: fewer, fatter grid steps).
        # TODO(synk): on v7x (2 TCs/chip) cap lane_batch at ceil(N/2) and use
        # pltpu.CORE_PARALLEL so both TensorCores get grid steps.
        budget = max(1, (2 << 20) // max(1, C * HW * 4))
        lane_batch = min(N, budget)
        while N % lane_batch:
            lane_batch -= 1
    assert N % lane_batch == 0
    G = N // lane_batch
    L = lane_batch * HW

    # Layout plumbing (wrapper-side): present one lane-dense (C, L) slab per
    # grid step, channels on sublanes.
    x_fold = (x_nchw.reshape(G, lane_batch, C, HW)
              .transpose(0, 2, 1, 3)
              .reshape(G, C, L))

    # Pack conv weights+bias as (C_out, 9*C_in + 1):
    #   wp[co, (ky*3+kx)*C + ci] = w_hwio[ky, kx, ci, co],   wp[co, 9*C] = b[co]
    def pack(w_hwio, b):
        wp = jnp.transpose(w_hwio, (3, 0, 1, 2)).reshape(C, 9 * C)
        return jnp.concatenate([wp, b.reshape(C, 1)], axis=1).astype(jnp.float32)

    w1p = pack(w1_hwio, b1)
    w2p = pack(w2_hwio, b2)

    masks = _make_tap_masks(H, W, lane_batch)          # (9, L) resident input

    kernel = functools.partial(_brm_kernel, W=W)

    # TODO(synk): for very large feature maps (per-block f32 footprint nearing
    # the scoped VMEM limit, esp. v7x's 64 MiB physical), add an H-row-tiled
    # grid axis with a one-row halo instead of whole-image blocks, and pad the
    # lane axis to a multiple of 128 when H*W is not already one.
    out_fold = pl.pallas_call(
        kernel,
        out_shape=jax.ShapeDtypeStruct((G, C, L), x_nchw.dtype),
        grid=(G,),
        in_specs=[
            pl.BlockSpec((9, L), lambda g: (0, 0)),            # masks (resident)
            pl.BlockSpec((None, C, L), lambda g: (g, 0, 0)),   # activations
            pl.BlockSpec((C, 9 * C + 1), lambda g: (0, 0)),    # conv1 w|b
            pl.BlockSpec((C, 9 * C + 1), lambda g: (0, 0)),    # conv2 w|b
        ],
        out_specs=pl.BlockSpec((None, C, L), lambda g: (g, 0, 0)),
        compiler_params=pltpu.CompilerParams(
            dimension_semantics=("parallel",),
            vmem_limit_bytes=32 * 1024 * 1024),
    )(masks, x_fold, w1p, w2p)

    return (out_fold.reshape(G, C, lane_batch, HW)
            .transpose(0, 2, 1, 3)
            .reshape(N, C, H, W))


def _reference_forward(x_nchw, w1_hwio, b1, w2_hwio, b2):
    """Pure-JAX reference matching PyTorch Conv2d(dim, dim, 3, padding=1)."""
    C = x_nchw.shape[1]
    dn = jax.lax.conv_dimension_numbers(
        x_nchw.shape, w1_hwio.shape, ('NCHW', 'HWIO', 'NCHW'))
    r = jax.lax.conv_general_dilated(
        x_nchw, w1_hwio, (1, 1), 'SAME', dimension_numbers=dn)
    r = r + b1.reshape(1, C, 1, 1)
    r = jnp.maximum(r, 0.0)
    r = jax.lax.conv_general_dilated(
        r, w2_hwio, (1, 1), 'SAME', dimension_numbers=dn)
    r = r + b2.reshape(1, C, 1, 1)
    return x_nchw + r


if __name__ == "__main__":
    N, C, H, W = 2, 4, 16, 16  # dim = 4

    key = jax.random.PRNGKey(0)
    kx, kw1, kb1, kw2, kb2 = jax.random.split(key, 5)

    x = jax.random.normal(kx, (N, C, H, W), dtype=jnp.float32)

    # Deterministic "Conv2d(dim, dim, 3)" params stored in HWIO (3, 3, C, C),
    # kaiming-uniform-like scaling.
    fan_in = C * 3 * 3
    bound = 1.0 / np.sqrt(fan_in)
    w1 = jax.random.uniform(kw1, (3, 3, C, C), jnp.float32, -bound, bound)
    b1 = jax.random.uniform(kb1, (C,), jnp.float32, -bound, bound)
    w2 = jax.random.uniform(kw2, (3, 3, C, C), jnp.float32, -bound, bound)
    b2 = jax.random.uniform(kb2, (C,), jnp.float32, -bound, bound)

    out = boundary_refine_forward(x, w1, b1, w2, b2)
    out = jax.block_until_ready(out)

    ref = jax.block_until_ready(_reference_forward(x, w1, b1, w2, b2))
    np.testing.assert_allclose(np.asarray(out), np.asarray(ref),
                               rtol=1e-5, atol=1e-5)

    print("KERNEL_OK")
</pallas_src>

<mosaic_0001>
module attributes {stable_mosaic.version = 11 : i64} {
  func.func @_brm_kernel(%arg0: i32, %arg1: memref<9x512xf32, #tpu.memory_space<vmem>>, %arg2: memref<1x4x512xf32, #tpu.memory_space<vmem>>, %arg3: memref<4x37xf32, #tpu.memory_space<vmem>>, %arg4: memref<4x37xf32, #tpu.memory_space<vmem>>, %arg5: memref<1x4x512xf32, #tpu.memory_space<vmem>>) attributes {dimension_semantics = [#tpu.dimension_semantics<parallel>], iteration_bounds = array<i64: 1>, scalar_prefetch = 0 : i64, scratch_operands = 0 : i64, tpu.core_type = #tpu.core_type<tc>, window_params = [{pipeline_mode = #tpu.pipeline_mode<synchronous>, transform_indices = @transform_0, window_bounds = array<i64: 9, 512>}, {transform_indices = @transform_1, window_bounds = array<i64: 1, 4, 512>}, {pipeline_mode = #tpu.pipeline_mode<synchronous>, transform_indices = @transform_2, window_bounds = array<i64: 4, 37>}, {pipeline_mode = #tpu.pipeline_mode<synchronous>, transform_indices = @transform_3, window_bounds = array<i64: 4, 37>}, {transform_indices = @transform_4, window_bounds = array<i64: 1, 4, 512>}]} {
    %c0 = arith.constant 0 : index
    %c0_0 = arith.constant 0 : index
    %c0_1 = arith.constant 0 : index
    %0 = vector.load %arg2[%c0, %c0_0, %c0_1] : memref<1x4x512xf32, #tpu.memory_space<vmem>>, vector<1x4x512xf32>
    %1 = vector.shape_cast %0 : vector<1x4x512xf32> to vector<4x512xf32>
    %c0_2 = arith.constant 0 : index
    %c0_3 = arith.constant 0 : index
    %2 = vector.load %arg1[%c0_2, %c0_3] : memref<9x512xf32, #tpu.memory_space<vmem>>, vector<9x512xf32>
    %cst = arith.constant 1.000000e+00 : f32
    %3 = vector.broadcast %cst : f32 to vector<1x512xf32>
    %c0_4 = arith.constant 0 : index
    %c0_5 = arith.constant 0 : index
    %4 = vector.load %arg3[%c0_4, %c0_5] : memref<4x37xf32, #tpu.memory_space<vmem>>, vector<4x37xf32>
    %c17_i32 = arith.constant 17 : i32
    %5 = tpu.dynamic_rotate %1 by %c17_i32 dim 1 : vector<4x512xf32>, i32 -> vector<4x512xf32>
    %6 = vector.extract_strided_slice %2 {offsets = [0, 0], sizes = [1, 512], strides = [1, 1]} : vector<9x512xf32> to vector<1x512xf32>
    %7 = vector.broadcast %6 : vector<1x512xf32> to vector<4x512xf32>
    %8 = arith.mulf %5, %7 : vector<4x512xf32>
    %c16_i32 = arith.constant 16 : i32
    %9 = tpu.dynamic_rotate %1 by %c16_i32 dim 1 : vector<4x512xf32>, i32 -> vector<4x512xf32>
    %10 = vector.extract_strided_slice %2 {offsets = [1, 0], sizes = [1, 512], strides = [1, 1]} : vector<9x512xf32> to vector<1x512xf32>
    %11 = vector.broadcast %10 : vector<1x512xf32> to vector<4x512xf32>
    %12 = arith.mulf %9, %11 : vector<4x512xf32>
    %c15_i32 = arith.constant 15 : i32
    %13 = tpu.dynamic_rotate %1 by %c15_i32 dim 1 : vector<4x512xf32>, i32 -> vector<4x512xf32>
    %14 = vector.extract_strided_slice %2 {offsets = [2, 0], sizes = [1, 512], strides = [1, 1]} : vector<9x512xf32> to vector<1x512xf32>
    %15 = vector.broadcast %14 : vector<1x512xf32> to vector<4x512xf32>
    %16 = arith.mulf %13, %15 : vector<4x512xf32>
    %c1_i32 = arith.constant 1 : i32
    %17 = tpu.dynamic_rotate %1 by %c1_i32 dim 1 : vector<4x512xf32>, i32 -> vector<4x512xf32>
    %18 = vector.extract_strided_slice %2 {offsets = [3, 0], sizes = [1, 512], strides = [1, 1]} : vector<9x512xf32> to vector<1x512xf32>
    %19 = vector.broadcast %18 : vector<1x512xf32> to vector<4x512xf32>
    %20 = arith.mulf %17, %19 : vector<4x512xf32>
    %c511_i32 = arith.constant 511 : i32
    %21 = tpu.dynamic_rotate %1 by %c511_i32 dim 1 : vector<4x512xf32>, i32 -> vector<4x512xf32>
    %22 = vector.extract_strided_slice %2 {offsets = [5, 0], sizes = [1, 512], strides = [1, 1]} : vector<9x512xf32> to vector<1x512xf32>
    %23 = vector.broadcast %22 : vector<1x512xf32> to vector<4x512xf32>
    %24 = arith.mulf %21, %23 : vector<4x512xf32>
    %c497_i32 = arith.constant 497 : i32
    %25 = tpu.dynamic_rotate %1 by %c497_i32 dim 1 : vector<4x512xf32>, i32 -> vector<4x512xf32>
    %26 = vector.extract_strided_slice %2 {offsets = [6, 0], sizes = [1, 512], strides = [1, 1]} : vector<9x512xf32> to vector<1x512xf32>
    %27 = vector.broadcast %26 : vector<1x512xf32> to vector<4x512xf32>
    %28 = arith.mulf %25, %27 : vector<4x512xf32>
    %c496_i32 = arith.constant 496 : i32
    %29 = tpu.dynamic_rotate %1 by %c496_i32 dim 1 : vector<4x512xf32>, i32 -> vector<4x512xf32>
    %30 = vector.extract_strided_slice %2 {offsets = [7, 0], sizes = [1, 512], strides = [1, 1]} : vector<9x512xf32> to vector<1x512xf32>
    %31 = vector.broadcast %30 : vector<1x512xf32> to vector<4x512xf32>
    %32 = arith.mulf %29, %31 : vector<4x512xf32>
    %c495_i32 = arith.constant 495 : i32
    %33 = tpu.dynamic_rotate %1 by %c495_i32 dim 1 : vector<4x512xf32>, i32 -> vector<4x512xf32>
    %34 = vector.extract_strided_slice %2 {offsets = [8, 0], sizes = [1, 512], strides = [1, 1]} : vector<9x512xf32> to vector<1x512xf32>
    %35 = vector.broadcast %34 : vector<1x512xf32> to vector<4x512xf32>
    %36 = arith.mulf %33, %35 : vector<4x512xf32>
    %37 = tpu.concatenate %8, %12, %16, %20, %1, %24, %28, %32, %36, %3 in 0 : vector<4x512xf32>, vector<4x512xf32>, vector<4x512xf32>, vector<4x512xf32>, vector<4x512xf32>, vector<4x512xf32>, vector<4x512xf32>, vector<4x512xf32>, vector<4x512xf32>, vector<1x512xf32> -> vector<37x512xf32>
    %cst_6 = arith.constant dense<0.000000e+00> : vector<4x512xf32>
    %38 = tpu.matmul %4, %37, %cst_6 {dimension_numbers = #tpu.dot_dimension_numbers<[1], [0], [0], [1], [0, 0, 1, 1], [], []>} : vector<4x37xf32>, vector<37x512xf32>, vector<4x512xf32> -> vector<4x512xf32>
    %cst_7 = arith.constant 0.000000e+00 : f32
    %39 = vector.broadcast %cst_7 : f32 to vector<4x512xf32>
    %40 = arith.maximumf %38, %39 : vector<4x512xf32>
    %c0_8 = arith.constant 0 : index
    %c0_9 = arith.constant 0 : index
    %41 = vector.load %arg4[%c0_8, %c0_9] : memref<4x37xf32, #tpu.memory_space<vmem>>, vector<4x37xf32>
    %c17_i32_10 = arith.constant 17 : i32
    %42 = tpu.dynamic_rotate %40 by %c17_i32_10 dim 1 : vector<4x512xf32>, i32 -> vector<4x512xf32>
    %43 = vector.extract_strided_slice %2 {offsets = [0, 0], sizes = [1, 512], strides = [1, 1]} : vector<9x512xf32> to vector<1x512xf32>
    %44 = vector.broadcast %43 : vector<1x512xf32> to vector<4x512xf32>
    %45 = arith.mulf %42, %44 : vector<4x512xf32>
    %c16_i32_11 = arith.constant 16 : i32
    %46 = tpu.dynamic_rotate %40 by %c16_i32_11 dim 1 : vector<4x512xf32>, i32 -> vector<4x512xf32>
    %47 = vector.extract_strided_slice %2 {offsets = [1, 0], sizes = [1, 512], strides = [1, 1]} : vector<9x512xf32> to vector<1x512xf32>
    %48 = vector.broadcast %47 : vector<1x512xf32> to vector<4x512xf32>
    %49 = arith.mulf %46, %48 : vector<4x512xf32>
    %c15_i32_12 = arith.constant 15 : i32
    %50 = tpu.dynamic_rotate %40 by %c15_i32_12 dim 1 : vector<4x512xf32>, i32 -> vector<4x512xf32>
    %51 = vector.extract_strided_slice %2 {offsets = [2, 0], sizes = [1, 512], strides = [1, 1]} : vector<9x512xf32> to vector<1x512xf32>
    %52 = vector.broadcast %51 : vector<1x512xf32> to vector<4x512xf32>
    %53 = arith.mulf %50, %52 : vector<4x512xf32>
    %c1_i32_13 = arith.constant 1 : i32
    %54 = tpu.dynamic_rotate %40 by %c1_i32_13 dim 1 : vector<4x512xf32>, i32 -> vector<4x512xf32>
    %55 = vector.extract_strided_slice %2 {offsets = [3, 0], sizes = [1, 512], strides = [1, 1]} : vector<9x512xf32> to vector<1x512xf32>
    %56 = vector.broadcast %55 : vector<1x512xf32> to vector<4x512xf32>
    %57 = arith.mulf %54, %56 : vector<4x512xf32>
    %c511_i32_14 = arith.constant 511 : i32
    %58 = tpu.dynamic_rotate %40 by %c511_i32_14 dim 1 : vector<4x512xf32>, i32 -> vector<4x512xf32>
    %59 = vector.extract_strided_slice %2 {offsets = [5, 0], sizes = [1, 512], strides = [1, 1]} : vector<9x512xf32> to vector<1x512xf32>
    %60 = vector.broadcast %59 : vector<1x512xf32> to vector<4x512xf32>
    %61 = arith.mulf %58, %60 : vector<4x512xf32>
    %c497_i32_15 = arith.constant 497 : i32
    %62 = tpu.dynamic_rotate %40 by %c497_i32_15 dim 1 : vector<4x512xf32>, i32 -> vector<4x512xf32>
    %63 = vector.extract_strided_slice %2 {offsets = [6, 0], sizes = [1, 512], strides = [1, 1]} : vector<9x512xf32> to vector<1x512xf32>
    %64 = vector.broadcast %63 : vector<1x512xf32> to vector<4x512xf32>
    %65 = arith.mulf %62, %64 : vector<4x512xf32>
    %c496_i32_16 = arith.constant 496 : i32
    %66 = tpu.dynamic_rotate %40 by %c496_i32_16 dim 1 : vector<4x512xf32>, i32 -> vector<4x512xf32>
    %67 = vector.extract_strided_slice %2 {offsets = [7, 0], sizes = [1, 512], strides = [1, 1]} : vector<9x512xf32> to vector<1x512xf32>
    %68 = vector.broadcast %67 : vector<1x512xf32> to vector<4x512xf32>
    %69 = arith.mulf %66, %68 : vector<4x512xf32>
    %c495_i32_17 = arith.constant 495 : i32
    %70 = tpu.dynamic_rotate %40 by %c495_i32_17 dim 1 : vector<4x512xf32>, i32 -> vector<4x512xf32>
    %71 = vector.extract_strided_slice %2 {offsets = [8, 0], sizes = [1, 512], strides = [1, 1]} : vector<9x512xf32> to vector<1x512xf32>
    %72 = vector.broadcast %71 : vector<1x512xf32> to vector<4x512xf32>
    %73 = arith.mulf %70, %72 : vector<4x512xf32>
    %74 = tpu.concatenate %45, %49, %53, %57, %40, %61, %65, %69, %73, %3 in 0 : vector<4x512xf32>, vector<4x512xf32>, vector<4x512xf32>, vector<4x512xf32>, vector<4x512xf32>, vector<4x512xf32>, vector<4x512xf32>, vector<4x512xf32>, vector<4x512xf32>, vector<1x512xf32> -> vector<37x512xf32>
    %cst_18 = arith.constant dense<0.000000e+00> : vector<4x512xf32>
    %75 = tpu.matmul %41, %74, %cst_18 {dimension_numbers = #tpu.dot_dimension_numbers<[1], [0], [0], [1], [0, 0, 1, 1], [], []>} : vector<4x37xf32>, vector<37x512xf32>, vector<4x512xf32> -> vector<4x512xf32>
    %76 = arith.addf %1, %75 : vector<4x512xf32>
    %c0_19 = arith.constant 0 : index
    %c0_20 = arith.constant 0 : index
    %c0_21 = arith.constant 0 : index
    %77 = vector.load %arg5[%c0_19, %c0_20, %c0_21] : memref<1x4x512xf32, #tpu.memory_space<vmem>>, vector<1x4x512xf32>
    %78 = vector.shape_cast %77 : vector<1x4x512xf32> to vector<4x512xf32>
    %79 = vector.shape_cast %76 : vector<4x512xf32> to vector<1x4x512xf32>
    tpu.vector_store %arg5[%c0_19, %c0_20, %c0_21], %79 {strides = array<i32>} : memref<1x4x512xf32, #tpu.memory_space<vmem>>, vector<1x4x512xf32>,
    return
  }
  func.func @transform_0(%arg0: i32) -> (i32, i32) {
    %c0_i32 = arith.constant 0 : i32
    %c0_i32_0 = arith.constant 0 : i32
    %c0_i32_1 = arith.constant 0 : i32
    return %c0_i32, %c0_i32_0 : i32, i32
  }
  func.func @transform_1(%arg0: i32) -> (i32, i32, i32) {
    %c0_i32 = arith.constant 0 : i32
    %c0_i32_0 = arith.constant 0 : i32
    %c0_i32_1 = arith.constant 0 : i32
    return %arg0, %c0_i32, %c0_i32_0 : i32, i32, i32
  }
  func.func @transform_2(%arg0: i32) -> (i32, i32) {
    %c0_i32 = arith.constant 0 : i32
    %c0_i32_0 = arith.constant 0 : i32
    %c0_i32_1 = arith.constant 0 : i32
    return %c0_i32, %c0_i32_0 : i32, i32
  }
  func.func @transform_3(%arg0: i32) -> (i32, i32) {
    %c0_i32 = arith.constant 0 : i32
    %c0_i32_0 = arith.constant 0 : i32
    %c0_i32_1 = arith.constant 0 : i32
    return %c0_i32, %c0_i32_0 : i32, i32
  }
  func.func @transform_4(%arg0: i32) -> (i32, i32, i32) {
    %c0_i32 = arith.constant 0 : i32
    %c0_i32_0 = arith.constant 0 : i32
    %c0_i32_1 = arith.constant 0 : i32
    return %arg0, %c0_i32, %c0_i32_0 : i32, i32, i32
  }
}

</mosaic_0001>

<llo_original>
// kernel: tpu_custom_call.1
$region0: #{tpu_custom_call.1}
  #allocation0 [shape = 'u32[]', space=smem, size = 0x4, offset = 0x4, fixed_abs, tag = 'smem constant byte address 0x4 - core index']
  #allocation1 [shape = 'u32[72,128]{1,0:T(1,128)}', space=vmem, size = 0x9000, scoped, tag = 'internal scratch']
  %s0 = inlined_call_operand.hbm [shape: f32[9,512], index: 0, kind: input, shape index: {}]
  %s1 = inlined_call_operand.hbm [shape: f32[1,4,512], index: 1, kind: input, shape index: {}]
  %s2 = inlined_call_operand.hbm [shape: f32[4,37], index: 2, kind: input, shape index: {}]
  %s3 = inlined_call_operand.hbm [shape: f32[4,37], index: 3, kind: input, shape index: {}]
  %s4 = inlined_call_operand.hbm [shape: f32[1,4,512], index: 4, kind: output, shape index: {}]
  %s5 = sld [smem:[#allocation0]]
  $region42: #{tpu_custom_call.1} parent=0
    _
  %s7 = ssub.s32 1, %s5
  %s8 = scalar_select 0, %s7, %s5
  $region1: #{tpu_custom_call.1} parent=0
    #allocation2 [shape = 'u8[32768]{0}', space=vmem, size = 0x8000, scoped, tag = 'input window, operand 0, single buffered']
    #allocation3 [shape = 's32[1]{0}', space=sflag, size = 0x4, scoped, tag = 'scoped memory for tpu_custom_call.1']
    #allocation4 [shape = 's32[1]{0}', space=sflag, size = 0x4, scoped, tag = 'scoped memory for tpu_custom_call.1']
    #allocation5 [shape = 'u8[8192]{0}', space=vmem, size = 0x2000, scoped, tag = 'input window, operand 1, single buffered']
    #allocation6 [shape = 's32[1]{0}', space=sflag, size = 0x4, scoped, tag = 'scoped memory for tpu_custom_call.1']
    #allocation7 [shape = 'u8[2048]{0}', space=vmem, size = 0x800, scoped, tag = 'input window, operand 2, single buffered']
    #allocation8 [shape = 'u8[2048]{0}', space=vmem, size = 0x800, scoped, tag = 'input window, operand 3, single buffered']
    #allocation9 [shape = 's32[1]{0}', space=sflag, size = 0x4, scoped, tag = 'scoped memory for tpu_custom_call.1']
    #allocation10 [shape = 'u8[8192]{0}', space=vmem, size = 0x2000, scoped, tag = 'output window, operand 0, single buffered']
    %9 = vsyncpa [#allocation3], 0
    %10 = vsyncpa [#allocation6], 0
    %11 = vsyncpa [#allocation9], 0
    %12 = vsyncpa [#allocation4], 0
    // Predicated region
    $region2: #{tpu_custom_call.1} parent=1 // pred_check
      _
    $region3: #{tpu_custom_call.1} parent=1 // pred_check_branch
      %14 = sbr.rel (0) target = $region5
    $region4: #{tpu_custom_call.1} parent=1 // pred_region
      %16 = vsyncadd [#allocation3], 0
      %s17 = sshll.u32 %s0, 4
      %s18 = int_to_ptr.hbm [resolvable:$true] %s17
      %s19 = sshll.u32 [#allocation2], 4
      %s20 = int_to_ptr.vmem [resolvable:$true] %s19
      %25 = dma.hbm_to_vmem [thread:$0]  %s18, 1024, %s20, [#allocation3], 512, 512, 32
    $region5: #{tpu_custom_call.1} parent=1 // pred_fallthru
      _
    // Predicated region
    $region6: #{tpu_custom_call.1} parent=1 // pred_check
      _
    $region7: #{tpu_custom_call.1} parent=1 // pred_check_branch
      %27 = sbr.rel (0) target = $region9
    $region8: #{tpu_custom_call.1} parent=1 // pred_region
      %29 = vsyncadd [#allocation6], 0
      %s31 = sshll.u32 %s1, 4
      %s32 = int_to_ptr.hbm [resolvable:$true] %s31
      %s33 = sshll.u32 [#allocation5], 4
      %s34 = int_to_ptr.vmem [resolvable:$true] %s33
      %36 = dma.hbm_to_vmem [thread:$0]  %s32, 256, %s34, [#allocation6]
    $region9: #{tpu_custom_call.1} parent=1 // pred_fallthru
      _
    // Predicated region
    $region10: #{tpu_custom_call.1} parent=1 // pred_check
      _
    $region11: #{tpu_custom_call.1} parent=1 // pred_check_branch
      %38 = sbr.rel (0) target = $region13
    $region12: #{tpu_custom_call.1} parent=1 // pred_region
      %40 = vsyncadd [#allocation6], 0
      %s42 = sshll.u32 %s2, 4
      %s43 = int_to_ptr.hbm [resolvable:$true] %s42
      %s44 = sshll.u32 [#allocation7], 4
      %s45 = int_to_ptr.vmem [resolvable:$true] %s44
      %47 = dma.hbm_to_vmem [thread:$0]  %s43, 64, %s45, [#allocation6]
    $region13: #{tpu_custom_call.1} parent=1 // pred_fallthru
      _
    // Predicated region
    $region14: #{tpu_custom_call.1} parent=1 // pred_check
      _
    $region15: #{tpu_custom_call.1} parent=1 // pred_check_branch
      %49 = sbr.rel (0) target = $region17
    $region16: #{tpu_custom_call.1} parent=1 // pred_region
      %51 = vsyncadd [#allocation9], 0
      %s53 = sshll.u32 %s3, 4
      %s54 = int_to_ptr.hbm [resolvable:$true] %s53
      %s55 = sshll.u32 [#allocation8], 4
      %s56 = int_to_ptr.vmem [resolvable:$true] %s55
      %58 = dma.hbm_to_vmem [thread:$0]  %s54, 64, %s56, [#allocation9]
    $region17: #{tpu_custom_call.1} parent=1 // pred_fallthru
      _
    // Predicated region
    $region18: #{tpu_custom_call.1} parent=1 // pred_check
      _
    $region19: #{tpu_custom_call.1} parent=1 // pred_check_branch
      %60 = sbr.rel (0) target = $region21
    $region20: #{tpu_custom_call.1} parent=1 // pred_region
      %62 = dma.done [#allocation3], 1024
    $region21: #{tpu_custom_call.1} parent=1 // pred_fallthru
      _
    // Predicated region
    $region22: #{tpu_custom_call.1} parent=1 // pred_check
      _
    $region23: #{tpu_custom_call.1} parent=1 // pred_check_branch
      %64 = sbr.rel (0) target = $region25
    $region24: #{tpu_custom_call.1} parent=1 // pred_region
      %66 = dma.done [#allocation6], 256
    $region25: #{tpu_custom_call.1} parent=1 // pred_fallthru
      _
    // Predicated region
    $region26: #{tpu_custom_call.1} parent=1 // pred_check
      _
    $region27: #{tpu_custom_call.1} parent=1 // pred_check_branch
      %68 = sbr.rel (0) target = $region29
    $region28: #{tpu_custom_call.1} parent=1 // pred_region
      %70 = dma.done [#allocation6], 64
    $region29: #{tpu_custom_call.1} parent=1 // pred_fallthru
      _
    // Predicated region
    $region30: #{tpu_custom_call.1} parent=1 // pred_check
      _
    $region31: #{tpu_custom_call.1} parent=1 // pred_check_branch
      %72 = sbr.rel (0) target = $region33
    $region32: #{tpu_custom_call.1} parent=1 // pred_region
      %74 = dma.done [#allocation9], 64
    $region33: #{tpu_custom_call.1} parent=1 // pred_fallthru
      _
    %v75 = vld [vmem:[#allocation5] sm:$0xff]
    %v76 = vld [vmem:[#allocation5 + $0x8] sm:$0xff]
    %v77 = vld [vmem:[#allocation2] sm:$0xff]
    %v78 = vld [vmem:[#allocation2 + $0x8] sm:$0xff]
    %v79 = vld [vmem:[#allocation2 + $0x10] sm:$0xff]
    %v80 = vld [vmem:[#allocation2 + $0x18] sm:$0xff]
    %v81 = vld [vmem:[#allocation2 + $0x20] sm:$0x1]
    %v82 = vld [vmem:[#allocation2 + $0x28] sm:$0x1]
    %v83 = vld [vmem:[#allocation2 + $0x30] sm:$0x1]
    %v84 = vld [vmem:[#allocation2 + $0x38] sm:$0x1]
    %v85 = vld [vmem:[#allocation7] sm:$0xf]
    %88 = vst [vmem:[#allocation1] ss:$2 sm:$0xff] %v75
    %s89 = scalar_lea.vmem [#allocation1], 16
    %90 = vst [vmem:[%s89] ss:$2 sm:$0xff] %v76
    %v91 = vld.sshfl [vmem:[#allocation1] sm:$0xff pattern:$0x75316420]
    %v92 = vld.sshfl [vmem:[#allocation1 + $0x8] sm:$0xff pattern:$0x75316420]
    %v93 = vld.sshfl [vmem:[#allocation1 + $0x10] sm:$0xff pattern:$0x75316420]
    %v94 = vld.sshfl [vmem:[#allocation1 + $0x18] sm:$0xff pattern:$0x75316420]
    %99 = vrot.lane.b32.xlu0 %v91, 17
    %v100 = vpop.permute.xlu0 %99
    %101 = vrot.lane.b32.xlu0 %v92, 17
    %v102 = vpop.permute.xlu0 %101
    %103 = vrot.lane.b32.xlu0 %v93, 17
    %v104 = vpop.permute.xlu0 %103
    %105 = vrot.lane.b32.xlu0 %v94, 17
    %v106 = vpop.permute.xlu0 %105
    %v107 = vlaneseq
    %v108 = vand.u32 %v107, 127
    %vm109 = vcmp.lt.s32.totalorder %v108, 17
    %v110 = vsel %vm109, %v104, %v106
    %v111 = vsel %vm109, %v102, %v104
    %v112 = vsel %vm109, %v100, %v102
    %v113 = vsel %vm109, %v106, %v100
    %v114 = vperm.slane %v77, 0
    %v115 = vperm.slane %v78, 0
    %v116 = vperm.slane %v79, 0
    %v117 = vperm.slane %v80, 0
    %v118 = vmul.f32 %v113, %v114
    %v119 = vmul.f32 %v112, %v115
    %v120 = vmul.f32 %v111, %v116
    %v121 = vmul.f32 %v110, %v117
    %122 = vst [vmem:[#allocation1] ss:$2 sm:$0xff] %v75
    %s123 = scalar_lea.vmem [#allocation1], 16
    %124 = vst [vmem:[%s123] ss:$2 sm:$0xff] %v76
    %v125 = vld.sshfl [vmem:[#allocation1] sm:$0xff pattern:$0x75316420]
    %v126 = vld.sshfl [vmem:[#allocation1 + $0x8] sm:$0xff pattern:$0x75316420]
    %v127 = vld.sshfl [vmem:[#allocation1 + $0x10] sm:$0xff pattern:$0x75316420]
    %v128 = vld.sshfl [vmem:[#allocation1 + $0x18] sm:$0xff pattern:$0x75316420]
    %133 = vrot.lane.b32.xlu0 %v125, 16
    %v134 = vpop.permute.xlu0 %133
    %135 = vrot.lane.b32.xlu0 %v126, 16
    %v136 = vpop.permute.xlu0 %135
    %137 = vrot.lane.b32.xlu0 %v127, 16
    %v138 = vpop.permute.xlu0 %137
    %139 = vrot.lane.b32.xlu0 %v128, 16
    %v140 = vpop.permute.xlu0 %139
    %vm141 = vcmp.lt.s32.totalorder %v108, 16
    %v142 = vsel %vm141, %v138, %v140
    %v143 = vsel %vm141, %v136, %v138
    %v144 = vsel %vm141, %v134, %v136
    %v145 = vsel %vm141, %v140, %v134
    %v146 = vperm.slane %v77, 1
    %v147 = vperm.slane %v78, 1
    %v148 = vperm.slane %v79, 1
    %v149 = vperm.slane %v80, 1
    %v150 = vmul.f32 %v145, %v146
    %v151 = vmul.f32 %v144, %v147
    %v152 = vmul.f32 %v143, %v148
    %v153 = vmul.f32 %v142, %v149
    %154 = vst [vmem:[#allocation1] ss:$2 sm:$0xff] %v75
    %s155 = scalar_lea.vmem [#allocation1], 16
    %156 = vst [vmem:[%s155] ss:$2 sm:$0xff] %v76
    %v157 = vld.sshfl [vmem:[#allocation1] sm:$0xff pattern:$0x75316420]
    %v158 = vld.sshfl [vmem:[#allocation1 + $0x8] sm:$0xff pattern:$0x75316420]
    %v159 = vld.sshfl [vmem:[#allocation1 + $0x10] sm:$0xff pattern:$0x75316420]
    %v160 = vld.sshfl [vmem:[#allocation1 + $0x18] sm:$0xff pattern:$0x75316420]
    %165 = vrot.lane.b32.xlu0 %v157, 15
    %v166 = vpop.permute.xlu0 %165
    %167 = vrot.lane.b32.xlu0 %v158, 15
    %v168 = vpop.permute.xlu0 %167
    %169 = vrot.lane.b32.xlu0 %v159, 15
    %v170 = vpop.permute.xlu0 %169
    %171 = vrot.lane.b32.xlu0 %v160, 15
    %v172 = vpop.permute.xlu0 %171
    %vm173 = vcmp.lt.s32.totalorder %v108, 15
    %v174 = vsel %vm173, %v170, %v172
    %v175 = vsel %vm173, %v168, %v170
    %v176 = vsel %vm173, %v166, %v168
    %v177 = vsel %vm173, %v172, %v166
    %v178 = vperm.slane %v77, 2
    %v179 = vperm.slane %v78, 2
    %v180 = vperm.slane %v79, 2
    %v181 = vperm.slane %v80, 2
    %v182 = vmul.f32 %v177, %v178
    %v183 = vmul.f32 %v176, %v179
    %v184 = vmul.f32 %v175, %v180
    %v185 = vmul.f32 %v174, %v181
    %186 = vst [vmem:[#allocation1] ss:$2 sm:$0xff] %v75
    %s187 = scalar_lea.vmem [#allocation1], 16
    %188 = vst [vmem:[%s187] ss:$2 sm:$0xff] %v76
    %v189 = vld.sshfl [vmem:[#allocation1] sm:$0xff pattern:$0x75316420]
    %v190 = vld.sshfl [vmem:[#allocation1 + $0x8] sm:$0xff pattern:$0x75316420]
    %v191 = vld.sshfl [vmem:[#allocation1 + $0x10] sm:$0xff pattern:$0x75316420]
    %v192 = vld.sshfl [vmem:[#allocation1 + $0x18] sm:$0xff pattern:$0x75316420]
    %197 = vrot.lane.b32.xlu0 %v189, 1
    %v198 = vpop.permute.xlu0 %197
    %199 = vrot.lane.b32.xlu0 %v190, 1
    %v200 = vpop.permute.xlu0 %199
    %201 = vrot.lane.b32.xlu0 %v191, 1
    %v202 = vpop.permute.xlu0 %201
    %203 = vrot.lane.b32.xlu0 %v192, 1
    %v204 = vpop.permute.xlu0 %203
    %vm205 = vcmp.lt.s32.totalorder %v108, 1
    %v206 = vsel %vm205, %v202, %v204
    %v207 = vsel %vm205, %v200, %v202
    %v208 = vsel %vm205, %v198, %v200
    %v209 = vsel %vm205, %v204, %v198
    %v210 = vperm.slane %v77, 3
    %v211 = vperm.slane %v78, 3
    %v212 = vperm.slane %v79, 3
    %v213 = vperm.slane %v80, 3
    %v214 = vmul.f32 %v209, %v210
    %v215 = vmul.f32 %v208, %v211
    %v216 = vmul.f32 %v207, %v212
    %v217 = vmul.f32 %v206, %v213
    %218 = vst [vmem:[#allocation1] ss:$2 sm:$0xff] %v75
    %s219 = scalar_lea.vmem [#allocation1], 16
    %220 = vst [vmem:[%s219] ss:$2 sm:$0xff] %v76
    %v221 = vld.sshfl [vmem:[#allocation1] sm:$0xff pattern:$0x75316420]
    %v222 = vld.sshfl [vmem:[#allocation1 + $0x8] sm:$0xff pattern:$0x75316420]
    %v223 = vld.sshfl [vmem:[#allocation1 + $0x10] sm:$0xff pattern:$0x75316420]
    %v224 = vld.sshfl [vmem:[#allocation1 + $0x18] sm:$0xff pattern:$0x75316420]
    %229 = vrot.lane.b32.xlu0 %v221, 127
    %v230 = vpop.permute.xlu0 %229
    %231 = vrot.lane.b32.xlu0 %v222, 127
    %v232 = vpop.permute.xlu0 %231
    %233 = vrot.lane.b32.xlu0 %v223, 127
    %v234 = vpop.permute.xlu0 %233
    %235 = vrot.lane.b32.xlu0 %v224, 127
    %v236 = vpop.permute.xlu0 %235
    %vm237 = vcmp.lt.s32.totalorder %v108, 127
    %v238 = vsel %vm237, %v234, %v236
    %v239 = vsel %vm237, %v232, %v234
    %v240 = vsel %vm237, %v230, %v232
    %v241 = vsel %vm237, %v236, %v230
    %v242 = vperm.slane %v77, 5
    %v243 = vperm.slane %v78, 5
    %v244 = vperm.slane %v79, 5
    %v245 = vperm.slane %v80, 5
    %v246 = vmul.f32 %v240, %v242
    %v247 = vmul.f32 %v239, %v243
    %v248 = vmul.f32 %v238, %v244
    %v249 = vmul.f32 %v241, %v245
    %250 = vst [vmem:[#allocation1] ss:$2 sm:$0xff] %v75
    %s251 = scalar_lea.vmem [#allocation1], 16
    %252 = vst [vmem:[%s251] ss:$2 sm:$0xff] %v76
    %v253 = vld.sshfl [vmem:[#allocation1] sm:$0xff pattern:$0x75316420]
    %v254 = vld.sshfl [vmem:[#allocation1 + $0x8] sm:$0xff pattern:$0x75316420]
    %v255 = vld.sshfl [vmem:[#allocation1 + $0x10] sm:$0xff pattern:$0x75316420]
    %v256 = vld.sshfl [vmem:[#allocation1 + $0x18] sm:$0xff pattern:$0x75316420]
    %261 = vrot.lane.b32.xlu0 %v253, 113
    %v262 = vpop.permute.xlu0 %261
    %263 = vrot.lane.b32.xlu0 %v254, 113
    %v264 = vpop.permute.xlu0 %263
    %265 = vrot.lane.b32.xlu0 %v255, 113
    %v266 = vpop.permute.xlu0 %265
    %267 = vrot.lane.b32.xlu0 %v256, 113
    %v268 = vpop.permute.xlu0 %267
    %vm269 = vcmp.lt.s32.totalorder %v108, 113
    %v270 = vsel %vm269, %v266, %v268
    %v271 = vsel %vm269, %v264, %v266
    %v272 = vsel %vm269, %v262, %v264
    %v273 = vsel %vm269, %v268, %v262
    %v274 = vperm.slane %v77, 6
    %v275 = vperm.slane %v78, 6
    %v276 = vperm.slane %v79, 6
    %v277 = vperm.slane %v80, 6
    %v278 = vmul.f32 %v272, %v274
    %v279 = vmul.f32 %v271, %v275
    %v280 = vmul.f32 %v270, %v276
    %v281 = vmul.f32 %v273, %v277
    %282 = vst [vmem:[#allocation1] ss:$2 sm:$0xff] %v75
    %s283 = scalar_lea.vmem [#allocation1], 16
    %284 = vst [vmem:[%s283] ss:$2 sm:$0xff] %v76
    %v285 = vld.sshfl [vmem:[#allocation1] sm:$0xff pattern:$0x75316420]
    %v286 = vld.sshfl [vmem:[#allocation1 + $0x8] sm:$0xff pattern:$0x75316420]
    %v287 = vld.sshfl [vmem:[#allocation1 + $0x10] sm:$0xff pattern:$0x75316420]
    %v288 = vld.sshfl [vmem:[#allocation1 + $0x18] sm:$0xff pattern:$0x75316420]
    %293 = vrot.lane.b32.xlu0 %v285, 112
    %v294 = vpop.permute.xlu0 %293
    %295 = vrot.lane.b32.xlu0 %v286, 112
    %v296 = vpop.permute.xlu0 %295
    %297 = vrot.lane.b32.xlu0 %v287, 112
    %v298 = vpop.permute.xlu0 %297
    %299 = vrot.lane.b32.xlu0 %v288, 112
    %v300 = vpop.permute.xlu0 %299
    %vm301 = vcmp.lt.s32.totalorder %v108, 112
    %v302 = vsel %vm301, %v298, %v300
    %v303 = vsel %vm301, %v296, %v298
    %v304 = vsel %vm301, %v294, %v296
    %v305 = vsel %vm301, %v300, %v294
    %v306 = vperm.slane %v77, 7
    %v307 = vperm.slane %v78, 7
    %v308 = vperm.slane %v79, 7
    %v309 = vperm.slane %v80, 7
    %v310 = vmul.f32 %v304, %v306
    %v311 = vmul.f32 %v303, %v307
    %v312 = vmul.f32 %v302, %v308
    %v313 = vmul.f32 %v305, %v309
    %314 = vst [vmem:[#allocation1] ss:$2 sm:$0xff] %v75
    %s315 = scalar_lea.vmem [#allocation1], 16
    %316 = vst [vmem:[%s315] ss:$2 sm:$0xff] %v76
    %v317 = vld.sshfl [vmem:[#allocation1] sm:$0xff pattern:$0x75316420]
    %v318 = vld.sshfl [vmem:[#allocation1 + $0x8] sm:$0xff pattern:$0x75316420]
    %v319 = vld.sshfl [vmem:[#allocation1 + $0x10] sm:$0xff pattern:$0x75316420]
    %v320 = vld.sshfl [vmem:[#allocation1 + $0x18] sm:$0xff pattern:$0x75316420]
    %325 = vrot.lane.b32.xlu0 %v317, 111
    %v326 = vpop.permute.xlu0 %325
    %327 = vrot.lane.b32.xlu0 %v318, 111
    %v328 = vpop.permute.xlu0 %327
    %329 = vrot.lane.b32.xlu0 %v319, 111
    %v330 = vpop.permute.xlu0 %329
    %331 = vrot.lane.b32.xlu0 %v320, 111
    %v332 = vpop.permute.xlu0 %331
    %vm333 = vcmp.lt.s32.totalorder %v108, 111
    %v334 = vsel %vm333, %v330, %v332
    %v335 = vsel %vm333, %v328, %v330
    %v336 = vsel %vm333, %v326, %v328
    %v337 = vsel %vm333, %v332, %v326
    %v338 = vperm.slane %v81, 0
    %v339 = vperm.slane %v82, 0
    %v340 = vperm.slane %v83, 0
    %v341 = vperm.slane %v84, 0
    %v342 = vmul.f32 %v336, %v338
    %v343 = vmul.f32 %v335, %v339
    %v344 = vmul.f32 %v334, %v340
    %v345 = vmul.f32 %v337, %v341
    %v350 = vrot.slane %v150, 4
    %v351 = vrot.slane %v151, 4
    %v352 = vrot.slane %v152, 4
    %v353 = vrot.slane %v153, 4
    %v362 = vrot.slane %v214, 4
    %v363 = vrot.slane %v215, 4
    %v364 = vrot.slane %v216, 4
    %v365 = vrot.slane %v217, 4
    %370 = vst [vmem:[#allocation1] ss:$2 sm:$0xff] %v75
    %s371 = scalar_lea.vmem [#allocation1], 16
    %372 = vst [vmem:[%s371] ss:$2 sm:$0xff] %v76
    %v373 = vld.sshfl [vmem:[#allocation1] sm:$0xff pattern:$0x75316420]
    %v374 = vld.sshfl [vmem:[#allocation1 + $0x8] sm:$0xff pattern:$0x75316420]
    %v375 = vld.sshfl [vmem:[#allocation1 + $0x10] sm:$0xff pattern:$0x75316420]
    %v376 = vld.sshfl [vmem:[#allocation1 + $0x18] sm:$0xff pattern:$0x75316420]
    %v385 = vrot.slane %v246, 4
    %v386 = vrot.slane %v247, 4
    %v387 = vrot.slane %v248, 4
    %v388 = vrot.slane %v249, 4
    %v397 = vrot.slane %v310, 4
    %v398 = vrot.slane %v311, 4
    %v399 = vrot.slane %v312, 4
    %v400 = vrot.slane %v313, 4
    %vm405 = vcmask 1043456
    %v406 = vsel %vm405, %v118, %v350
    %v407 = vsel %vm405, %v119, %v351
    %v408 = vsel %vm405, %v120, %v352
    %v409 = vsel %vm405, %v121, %v353
    %v410 = vsel %vm405, %v182, %v362
    %v411 = vsel %vm405, %v183, %v363
    %v412 = vsel %vm405, %v184, %v364
    %v413 = vsel %vm405, %v185, %v365
    %v414 = vsel %vm405, %v373, %v385
    %v415 = vsel %vm405, %v374, %v386
    %v416 = vsel %vm405, %v375, %v387
    %v417 = vsel %vm405, %v376, %v388
    %v418 = vsel %vm405, %v278, %v397
    %v419 = vsel %vm405, %v279, %v398
    %v420 = vsel %vm405, %v280, %v399
    %v421 = vsel %vm405, %v281, %v400
    %v422 = vsel %vm405, %v342, 1.0
    %v423 = vsel %vm405, %v343, 1.0
    %v424 = vsel %vm405, %v344, 1.0
    %v425 = vsel %vm405, %v345, 1.0
    %vm426 = vcmask 302080
    %v428 = vsel %vm426, %v85, 0
    %vm430 = vcmask 1044480
    %v432 = vsel %vm430, %v422, 0
    %v435 = vsel %vm430, %v423, 0
    %v438 = vsel %vm430, %v424, 0
    %v441 = vsel %vm430, %v425, 0
    %443 = vmatpush.msra.mxu0 0.0
    %444 = vmatpush.msra.mxu0 0.0
    %445 = vmatpush.msra.mxu0 0.0
    %446 = vmatpush.msra.mxu0 0.0
    %447 = vmatpush.msra.mxu0 0.0
    %448 = vmatpush.msra.mxu0 0.0
    %449 = vmatpush.msra.mxu0 0.0
    %450 = vmatpush.msra.mxu0 0.0
    %451 = vmatpush.msra.mxu0 0.0
    %452 = vmatpush.msra.mxu0 0.0
    %453 = vmatpush.msra.mxu0 0.0
    %454 = vmatpush.msra.mxu0 %v432
    %455 = vmatpush.msra.mxu0 %v418
    %456 = vmatpush.msra.mxu0 %v414
    %457 = vmatpush.msra.mxu0 %v410
    %458 = vmatpush.msra.mxu0 %v406
    %459 = vmatmul.f32.gmra.mxu0 %v428
    %v460 = vpop.f32.mrf.mxu0
    %v461 = vadd.f32 0.0, %v460
    %462 = vdwg.mxu0
    %463 = vmatpush.msra.mxu0 0.0
    %464 = vmatpush.msra.mxu0 0.0
    %465 = vmatpush.msra.mxu0 0.0
    %466 = vmatpush.msra.mxu0 0.0
    %467 = vmatpush.msra.mxu0 0.0
    %468 = vmatpush.msra.mxu0 0.0
    %469 = vmatpush.msra.mxu0 0.0
    %470 = vmatpush.msra.mxu0 0.0
    %471 = vmatpush.msra.mxu0 0.0
    %472 = vmatpush.msra.mxu0 0.0
    %473 = vmatpush.msra.mxu0 0.0
    %474 = vmatpush.msra.mxu0 %v435
    %475 = vmatpush.msra.mxu0 %v419
    %476 = vmatpush.msra.mxu0 %v415
    %477 = vmatpush.msra.mxu0 %v411
    %478 = vmatpush.msra.mxu0 %v407
    %479 = vmatmul.f32.gmra.mxu0 %v428
    %v480 = vpop.f32.mrf.mxu0
    %v481 = vadd.f32 0.0, %v480
    %482 = vdwg.mxu0
    %483 = vmatpush.msra.mxu0 0.0
    %484 = vmatpush.msra.mxu0 0.0
    %485 = vmatpush.msra.mxu0 0.0
    %486 = vmatpush.msra.mxu0 0.0
    %487 = vmatpush.msra.mxu0 0.0
    %488 = vmatpush.msra.mxu0 0.0
    %489 = vmatpush.msra.mxu0 0.0
    %490 = vmatpush.msra.mxu0 0.0
    %491 = vmatpush.msra.mxu0 0.0
    %492 = vmatpush.msra.mxu0 0.0
    %493 = vmatpush.msra.mxu0 0.0
    %494 = vmatpush.msra.mxu0 %v438
    %495 = vmatpush.msra.mxu0 %v420
    %496 = vmatpush.msra.mxu0 %v416
    %497 = vmatpush.msra.mxu0 %v412
    %498 = vmatpush.msra.mxu0 %v408
    %499 = vmatmul.f32.gmra.mxu0 %v428
    %v500 = vpop.f32.mrf.mxu0
    %v501 = vadd.f32 0.0, %v500
    %502 = vdwg.mxu0
    %503 = vmatpush.msra.mxu0 0.0
    %504 = vmatpush.msra.mxu0 0.0
    %505 = vmatpush.msra.mxu0 0.0
    %506 = vmatpush.msra.mxu0 0.0
    %507 = vmatpush.msra.mxu0 0.0
    %508 = vmatpush.msra.mxu0 0.0
    %509 = vmatpush.msra.mxu0 0.0
    %510 = vmatpush.msra.mxu0 0.0
    %511 = vmatpush.msra.mxu0 0.0
    %512 = vmatpush.msra.mxu0 0.0
    %513 = vmatpush.msra.mxu0 0.0
    %514 = vmatpush.msra.mxu0 %v441
    %515 = vmatpush.msra.mxu0 %v421
    %516 = vmatpush.msra.mxu0 %v417
    %517 = vmatpush.msra.mxu0 %v413
    %518 = vmatpush.msra.mxu0 %v409
    %519 = vmatmul.f32.gmra.mxu0 %v428
    %v520 = vpop.f32.mrf.mxu0
    %v521 = vadd.f32 0.0, %v520
    %522 = vdwg.mxu0
    %v523 = vmax.f32 %v461, 0.0
    %v524 = vmax.f32 %v481, 0.0
    %v525 = vmax.f32 %v501, 0.0
    %v526 = vmax.f32 %v521, 0.0
    %v527 = vld [vmem:[#allocation8] sm:$0xf]
    %528 = vrot.lane.b32.xlu0 %v523, 17
    %v529 = vpop.permute.xlu0 %528
    %530 = vrot.lane.b32.xlu0 %v524, 17
    %v531 = vpop.permute.xlu0 %530
    %532 = vrot.lane.b32.xlu0 %v525, 17
    %v533 = vpop.permute.xlu0 %532
    %534 = vrot.lane.b32.xlu0 %v526, 17
    %v535 = vpop.permute.xlu0 %534
    %v536 = vsel %vm109, %v533, %v535
    %v537 = vsel %vm109, %v531, %v533
    %v538 = vsel %vm109, %v529, %v531
    %v539 = vsel %vm109, %v535, %v529
    %v540 = vmul.f32 %v539, %v114
    %v541 = vmul.f32 %v538, %v115
    %v542 = vmul.f32 %v537, %v116
    %v543 = vmul.f32 %v536, %v117
    %544 = vrot.lane.b32.xlu0 %v523, 16
    %v545 = vpop.permute.xlu0 %544
    %546 = vrot.lane.b32.xlu0 %v524, 16
    %v547 = vpop.permute.xlu0 %546
    %548 = vrot.lane.b32.xlu0 %v525, 16
    %v549 = vpop.permute.xlu0 %548
    %550 = vrot.lane.b32.xlu0 %v526, 16
    %v551 = vpop.permute.xlu0 %550
    %v552 = vsel %vm141, %v549, %v551
    %v553 = vsel %vm141, %v547, %v549
    %v554 = vsel %vm141, %v545, %v547
    %v555 = vsel %vm141, %v551, %v545
    %v556 = vmul.f32 %v555, %v146
    %v557 = vmul.f32 %v554, %v147
    %v558 = vmul.f32 %v553, %v148
    %v559 = vmul.f32 %v552, %v149
    %560 = vrot.lane.b32.xlu0 %v523, 15
    %v561 = vpop.permute.xlu0 %560
    %562 = vrot.lane.b32.xlu0 %v524, 15
    %v563 = vpop.permute.xlu0 %562
    %564 = vrot.lane.b32.xlu0 %v525, 15
    %v565 = vpop.permute.xlu0 %564
    %566 = vrot.lane.b32.xlu0 %v526, 15
    %v567 = vpop.permute.xlu0 %566
    %v568 = vsel %vm173, %v565, %v567
    %v569 = vsel %vm173, %v563, %v565
    %v570 = vsel %vm173, %v561, %v563
    %v571 = vsel %vm173, %v567, %v561
    %v572 = vmul.f32 %v571, %v178
    %v573 = vmul.f32 %v570, %v179
    %v574 = vmul.f32 %v569, %v180
    %v575 = vmul.f32 %v568, %v181
    %576 = vrot.lane.b32.xlu0 %v523, 1
    %v577 = vpop.permute.xlu0 %576
    %578 = vrot.lane.b32.xlu0 %v524, 1
    %v579 = vpop.permute.xlu0 %578
    %580 = vrot.lane.b32.xlu0 %v525, 1
    %v581 = vpop.permute.xlu0 %580
    %582 = vrot.lane.b32.xlu0 %v526, 1
    %v583 = vpop.permute.xlu0 %582
    %v584 = vsel %vm205, %v581, %v583
    %v585 = vsel %vm205, %v579, %v581
    %v586 = vsel %vm205, %v577, %v579
    %v587 = vsel %vm205, %v583, %v577
    %v588 = vmul.f32 %v587, %v210
    %v589 = vmul.f32 %v586, %v211
    %v590 = vmul.f32 %v585, %v212
    %v591 = vmul.f32 %v584, %v213
    %592 = vrot.lane.b32.xlu0 %v523, 127
    %v593 = vpop.permute.xlu0 %592
    %594 = vrot.lane.b32.xlu0 %v524, 127
    %v595 = vpop.permute.xlu0 %594
    %596 = vrot.lane.b32.xlu0 %v525, 127
    %v597 = vpop.permute.xlu0 %596
    %598 = vrot.lane.b32.xlu0 %v526, 127
    %v599 = vpop.permute.xlu0 %598
    %v600 = vsel %vm237, %v597, %v599
    %v601 = vsel %vm237, %v595, %v597
    %v602 = vsel %vm237, %v593, %v595
    %v603 = vsel %vm237, %v599, %v593
    %v604 = vmul.f32 %v602, %v242
    %v605 = vmul.f32 %v601, %v243
    %v606 = vmul.f32 %v600, %v244
    %v607 = vmul.f32 %v603, %v245
    %608 = vrot.lane.b32.xlu0 %v523, 113
    %v609 = vpop.permute.xlu0 %608
    %610 = vrot.lane.b32.xlu0 %v524, 113
    %v611 = vpop.permute.xlu0 %610
    %612 = vrot.lane.b32.xlu0 %v525, 113
    %v613 = vpop.permute.xlu0 %612
    %614 = vrot.lane.b32.xlu0 %v526, 113
    %v615 = vpop.permute.xlu0 %614
    %v616 = vsel %vm269, %v613, %v615
    %v617 = vsel %vm269, %v611, %v613
    %v618 = vsel %vm269, %v609, %v611
    %v619 = vsel %vm269, %v615, %v609
    %v620 = vmul.f32 %v618, %v274
    %v621 = vmul.f32 %v617, %v275
    %v622 = vmul.f32 %v616, %v276
    %v623 = vmul.f32 %v619, %v277
    %624 = vrot.lane.b32.xlu0 %v523, 112
    %v625 = vpop.permute.xlu0 %624
    %626 = vrot.lane.b32.xlu0 %v524, 112
    %v627 = vpop.permute.xlu0 %626
    %628 = vrot.lane.b32.xlu0 %v525, 112
    %v629 = vpop.permute.xlu0 %628
    %630 = vrot.lane.b32.xlu0 %v526, 112
    %v631 = vpop.permute.xlu0 %630
    %v632 = vsel %vm301, %v629, %v631
    %v633 = vsel %vm301, %v627, %v629
    %v634 = vsel %vm301, %v625, %v627
    %v635 = vsel %vm301, %v631, %v625
    %v636 = vmul.f32 %v634, %v306
    %v637 = vmul.f32 %v633, %v307
    %v638 = vmul.f32 %v632, %v308
    %v639 = vmul.f32 %v635, %v309
    %640 = vrot.lane.b32.xlu0 %v523, 111
    %v641 = vpop.permute.xlu0 %640
    %642 = vrot.lane.b32.xlu0 %v524, 111
    %v643 = vpop.permute.xlu0 %642
    %644 = vrot.lane.b32.xlu0 %v525, 111
    %v645 = vpop.permute.xlu0 %644
    %646 = vrot.lane.b32.xlu0 %v526, 111
    %v647 = vpop.permute.xlu0 %646
    %v648 = vsel %vm333, %v645, %v647
    %v649 = vsel %vm333, %v643, %v645
    %v650 = vsel %vm333, %v641, %v643
    %v651 = vsel %vm333, %v647, %v641
    %v652 = vmul.f32 %v650, %v338
    %v653 = vmul.f32 %v649, %v339
    %v654 = vmul.f32 %v648, %v340
    %v655 = vmul.f32 %v651, %v341
    %v660 = vrot.slane %v556, 4
    %v661 = vrot.slane %v557, 4
    %v662 = vrot.slane %v558, 4
    %v663 = vrot.slane %v559, 4
    %v672 = vrot.slane %v588, 4
    %v673 = vrot.slane %v589, 4
    %v674 = vrot.slane %v590, 4
    %v675 = vrot.slane %v591, 4
    %v684 = vrot.slane %v604, 4
    %v685 = vrot.slane %v605, 4
    %v686 = vrot.slane %v606, 4
    %v687 = vrot.slane %v607, 4
    %v696 = vrot.slane %v636, 4
    %v697 = vrot.slane %v637, 4
    %v698 = vrot.slane %v638, 4
    %v699 = vrot.slane %v639, 4
    %v704 = vsel %vm405, %v540, %v660
    %v705 = vsel %vm405, %v541, %v661
    %v706 = vsel %vm405, %v542, %v662
    %v707 = vsel %vm405, %v543, %v663
    %v708 = vsel %vm405, %v572, %v672
    %v709 = vsel %vm405, %v573, %v673
    %v710 = vsel %vm405, %v574, %v674
    %v711 = vsel %vm405, %v575, %v675
    %v712 = vsel %vm405, %v523, %v684
    %v713 = vsel %vm405, %v524, %v685
    %v714 = vsel %vm405, %v525, %v686
    %v715 = vsel %vm405, %v526, %v687
    %v716 = vsel %vm405, %v620, %v696
    %v717 = vsel %vm405, %v621, %v697
    %v718 = vsel %vm405, %v622, %v698
    %v719 = vsel %vm405, %v623, %v699
    %v720 = vsel %vm405, %v652, 1.0
    %v721 = vsel %vm405, %v653, 1.0
    %v722 = vsel %vm405, %v654, 1.0
    %v723 = vsel %vm405, %v655, 1.0
    %v725 = vsel %vm426, %v527, 0
    %v728 = vsel %vm430, %v720, 0
    %v731 = vsel %vm430, %v721, 0
    %v734 = vsel %vm430, %v722, 0
    %v737 = vsel %vm430, %v723, 0
    %739 = vmatpush.msra.mxu0 0.0
    %740 = vmatpush.msra.mxu0 0.0
    %741 = vmatpush.msra.mxu0 0.0
    %742 = vmatpush.msra.mxu0 0.0
    %743 = vmatpush.msra.mxu0 0.0
    %744 = vmatpush.msra.mxu0 0.0
    %745 = vmatpush.msra.mxu0 0.0
    %746 = vmatpush.msra.mxu0 0.0
    %747 = vmatpush.msra.mxu0 0.0
    %748 = vmatpush.msra.mxu0 0.0
    %749 = vmatpush.msra.mxu0 0.0
    %750 = vmatpush.msra.mxu0 %v728
    %751 = vmatpush.msra.mxu0 %v716
    %752 = vmatpush.msra.mxu0 %v712
    %753 = vmatpush.msra.mxu0 %v708
    %754 = vmatpush.msra.mxu0 %v704
    %755 = vmatmul.f32.gmra.mxu0 %v725
    %v756 = vpop.f32.mrf.mxu0
    %v757 = vadd.f32 0.0, %v756
    %758 = vdwg.mxu0
    %759 = vmatpush.msra.mxu0 0.0
    %760 = vmatpush.msra.mxu0 0.0
    %761 = vmatpush.msra.mxu0 0.0
    %762 = vmatpush.msra.mxu0 0.0
    %763 = vmatpush.msra.mxu0 0.0
    %764 = vmatpush.msra.mxu0 0.0
    %765 = vmatpush.msra.mxu0 0.0
    %766 = vmatpush.msra.mxu0 0.0
    %767 = vmatpush.msra.mxu0 0.0
    %768 = vmatpush.msra.mxu0 0.0
    %769 = vmatpush.msra.mxu0 0.0
    %770 = vmatpush.msra.mxu0 %v731
    %771 = vmatpush.msra.mxu0 %v717
    %772 = vmatpush.msra.mxu0 %v713
    %773 = vmatpush.msra.mxu0 %v709
    %774 = vmatpush.msra.mxu0 %v705
    %775 = vmatmul.f32.gmra.mxu0 %v725
    %v776 = vpop.f32.mrf.mxu0
    %v777 = vadd.f32 0.0, %v776
    %778 = vdwg.mxu0
    %779 = vmatpush.msra.mxu0 0.0
    %780 = vmatpush.msra.mxu0 0.0
    %781 = vmatpush.msra.mxu0 0.0
    %782 = vmatpush.msra.mxu0 0.0
    %783 = vmatpush.msra.mxu0 0.0
    %784 = vmatpush.msra.mxu0 0.0
    %785 = vmatpush.msra.mxu0 0.0
    %786 = vmatpush.msra.mxu0 0.0
    %787 = vmatpush.msra.mxu0 0.0
    %788 = vmatpush.msra.mxu0 0.0
    %789 = vmatpush.msra.mxu0 0.0
    %790 = vmatpush.msra.mxu0 %v734
    %791 = vmatpush.msra.mxu0 %v718
    %792 = vmatpush.msra.mxu0 %v714
    %793 = vmatpush.msra.mxu0 %v710
    %794 = vmatpush.msra.mxu0 %v706
    %795 = vmatmul.f32.gmra.mxu0 %v725
    %v796 = vpop.f32.mrf.mxu0
    %v797 = vadd.f32 0.0, %v796
    %798 = vdwg.mxu0
    %799 = vmatpush.msra.mxu0 0.0
    %800 = vmatpush.msra.mxu0 0.0
    %801 = vmatpush.msra.mxu0 0.0
    %802 = vmatpush.msra.mxu0 0.0
    %803 = vmatpush.msra.mxu0 0.0
    %804 = vmatpush.msra.mxu0 0.0
    %805 = vmatpush.msra.mxu0 0.0
    %806 = vmatpush.msra.mxu0 0.0
    %807 = vmatpush.msra.mxu0 0.0
    %808 = vmatpush.msra.mxu0 0.0
    %809 = vmatpush.msra.mxu0 0.0
    %810 = vmatpush.msra.mxu0 %v737
    %811 = vmatpush.msra.mxu0 %v719
    %812 = vmatpush.msra.mxu0 %v715
    %813 = vmatpush.msra.mxu0 %v711
    %814 = vmatpush.msra.mxu0 %v707
    %815 = vmatmul.f32.gmra.mxu0 %v725
    %v816 = vpop.f32.mrf.mxu0
    %v817 = vadd.f32 0.0, %v816
    %818 = vdwg.mxu0
    %v823 = vrot.slane %v777, 4
    %v824 = vrot.slane %v817, 4
    %v825 = vsel %vm405, %v757, %v823
    %v826 = vsel %vm405, %v797, %v824
    %v829 = vadd.f32 %v75, %v825
    %v830 = vadd.f32 %v76, %v826
    %831 = vst [vmem:[#allocation10] sm:$0xff] %v829
    %832 = vst [vmem:[#allocation10 + $0x8] sm:$0xff] %v830
    // Predicated region
    $region34: #{tpu_custom_call.1} parent=1 // pred_check
      _
    $region35: #{tpu_custom_call.1} parent=1 // pred_check_branch
      %834 = sbr.rel (0) target = $region37
    $region36: #{tpu_custom_call.1} parent=1 // pred_region
      %836 = vsyncadd [#allocation4], 0
      %s838 = sshll.u32 [#allocation10], 4
      %s839 = int_to_ptr.vmem [resolvable:$true] %s838
      %s840 = sshll.u32 %s4, 4
      %s841 = int_to_ptr.hbm [resolvable:$true] %s840
      %843 = dma.vmem_to_hbm [thread:$0]  %s839, 256, %s841, [#allocation4]
    $region37: #{tpu_custom_call.1} parent=1 // pred_fallthru
      _
    // Predicated region
    $region38: #{tpu_custom_call.1} parent=1 // pred_check
      _
    $region39: #{tpu_custom_call.1} parent=1 // pred_check_branch
      %845 = sbr.rel (0) target = $region41
    $region40: #{tpu_custom_call.1} parent=1 // pred_region
      %847 = dma.done [#allocation4], 256
    $region41: #{tpu_custom_call.1} parent=1 // pred_fallthru
      _
    %848 = vsyncpa [#allocation3], 1
    %849 = vsyncpa [#allocation6], 1
    %850 = vsyncpa [#allocation9], 1
    %851 = vsyncpa [#allocation4], 1

</llo_original>
